<compile_context>
chip_gen: v5e
topology: v5e:2x2
jax: 0.10.0
libtpu: 0.0.40
codegen_flags: <defaults>
</compile_context>

<pallas_src>
import numpy as np
import jax
import jax.numpy as jnp
from jax.experimental import pallas as pl
from jax.experimental.pallas import tpu as pltpu


# ----------------------------------------------------------------------------------------
# Tiling helper
# ----------------------------------------------------------------------------------------
def _pick_h_tile(H, fh):
    """Largest H-tile <= ~256 rows that divides H and keeps the int8 blocks sublane-aligned.

    TH must be a multiple of 32*fh so that both the (TH, W) int8 output tile and the
    (TH // fh, W) int8 input tile satisfy the int8 (32, 128) min-tile constraint.  Falls back
    to the full H (a block equal to the full dim is always legal) when H is small or awkward.
    """
    unit = 32 * fh
    if H % unit != 0 or H <= unit:
        return H
    th = unit
    while th * 2 <= min(H, 256) and H % (th * 2) == 0:
        th *= 2
    return th


# ----------------------------------------------------------------------------------------
# Main path: integer upsample ratios (normal MedSAM case) -- pure repeat, no MXU.
# ----------------------------------------------------------------------------------------
def _row_repeat_kernel(mask_ref, out_ref):
    """fh-fold row repeat of a pre-thresholded, column-repeated mask tile.

    mask_ref: (1, TH // fh, W) int8  -- 0/1 mask rows for this (batch, H-tile) grid point
    out_ref:  (1, TH, W)       int8  -- nearest-upsampled 0/1 mask tile
    """
    th_m, W = mask_ref.shape[1], mask_ref.shape[2]
    TH = out_ref.shape[1]
    fh = TH // th_m
    # Widen to 32-bit (dense, well-supported vreg layout) and repeat each row fh times via a
    # sublane broadcast + lane-width-preserving reshape: no MXU, no cross-lane shuffles, and
    # the store is a lane-dense int8 (TH, W) tile.
    m = mask_ref[0].astype(jnp.int32)                                    # (th_m, W)
    rep = jnp.broadcast_to(m[:, None, :], (th_m, fh, W)).reshape(TH, W)  # (TH, W)
    out_ref[0] = rep.astype(jnp.int8)


# ----------------------------------------------------------------------------------------
# Fallback path: non-integer ratios -- exact nearest-neighbour via one-hot selection matmuls.
# ----------------------------------------------------------------------------------------
def _onehot_upsample_kernel(mask_ref, row_sel_ref, col_sel_ref, out_ref):
    """mask_ref:    (1, h_m, w_m) bf16  -- 0/1 (thresholded in f32 by the wrapper)
       row_sel_ref: (TH, h_m)     bf16  -- one-hot row selection for this H tile
       col_sel_ref: (w_m, W)      bf16  -- one-hot col selection (constant across the grid)
       out_ref:     (1, TH, W)    int8
    """
    m = mask_ref[0]
    # bf16 accumulation is exact here (every output element equals one 0/1 source element);
    # no intermediate cast pass, half the (TH, W) result footprint (review item 2).
    mu = jnp.dot(row_sel_ref[...], m, preferred_element_type=jnp.bfloat16)    # (TH, w_m)
    up = jnp.dot(mu, col_sel_ref[...], preferred_element_type=jnp.bfloat16)   # (TH, W)
    out_ref[0] = up.astype(jnp.int8)            # values are exactly 0.0 / 1.0 -> no compare


# ----------------------------------------------------------------------------------------
# Wrappers
# ----------------------------------------------------------------------------------------
def upsample_mask_nearest(mask, H, W):
    """PyTorch `F.interpolate(mask.float(), size=(H, W)) > 0.5`, channel 0, as int8 (B,H,W)."""
    B = mask.shape[0]
    h_m, w_m = mask.shape[2], mask.shape[3]
    # Threshold in f32 on the small mask BEFORE any low-precision cast (exact for nearest).
    mask_bin = (mask[:, 0].astype(jnp.float32) > 0.5).astype(jnp.int8)   # (B, h_m, w_m)

    if H % h_m == 0 and W % w_m == 0:
        fh, fw = H // h_m, W // w_m
        # fw-fold column (lane) repeat done once in XLA on the tiny h_m-tall mask: fh x less
        # data than at full resolution, and it keeps the kernel free of lane interleaves.
        mask_colrep = mask_bin if fw == 1 else jnp.repeat(mask_bin, fw, axis=-1)  # (B,h_m,W)

        TH = _pick_h_tile(H, fh)
        th_m = TH // fh
        return pl.pallas_call(
            _row_repeat_kernel,
            grid=(B, H // TH),
            in_specs=[pl.BlockSpec((1, th_m, W), lambda b, t: (b, t, 0))],
            out_specs=pl.BlockSpec((1, TH, W), lambda b, t: (b, t, 0)),
            out_shape=jax.ShapeDtypeStruct((B, H, W), jnp.int8),
            compiler_params=pltpu.CompilerParams(
                dimension_semantics=("parallel", "arbitrary")),
        )(mask_colrep)

    # ---- fallback: non-integer ratios ----
    src_h = (jnp.arange(H, dtype=jnp.int32) * h_m) // H
    row_sel = (src_h[:, None] == jnp.arange(h_m, dtype=jnp.int32)[None, :]).astype(jnp.bfloat16)
    src_w = (jnp.arange(W, dtype=jnp.int32) * w_m) // W
    col_sel = (jnp.arange(w_m, dtype=jnp.int32)[:, None] == src_w[None, :]).astype(jnp.bfloat16)
    mask_bf16 = mask_bin.astype(jnp.bfloat16)     # exact: values already 0/1

    TH = _pick_h_tile(H, 1)
    return pl.pallas_call(
        _onehot_upsample_kernel,
        grid=(B, H // TH),
        in_specs=[
            pl.BlockSpec((1, h_m, w_m), lambda b, t: (b, 0, 0)),
            pl.BlockSpec((TH, h_m), lambda b, t: (t, 0)),
            # constant across the whole grid -> single buffer, DMA'd once (review item 6)
            pl.BlockSpec((w_m, W), lambda b, t: (0, 0), pipeline_mode=pl.Buffered(1)),
        ],
        out_specs=pl.BlockSpec((1, TH, W), lambda b, t: (b, t, 0)),
        out_shape=jax.ShapeDtypeStruct((B, H, W), jnp.int8),
        # H tiling keeps the per-step working set small on every generation (v5e 16 MiB
        # scoped default, v7x 64 MiB physical) -- no vmem_limit_bytes override needed.
        compiler_params=pltpu.CompilerParams(
            dimension_semantics=("parallel", "arbitrary")),
    )(mask_bf16, row_sel, col_sel)


def masked_prediction(heatmap_logits, mask):
    """Device-side part of MaskedPredictionModule.forward.

    Computes the valid-loss-region mask at heatmap resolution with a Pallas kernel and
    returns it as int8 (B, H, W).  heatmap_logits is NOT transposed / flattened on device:
    the NCHW->NHWC rearrange would move ~30x more HBM bytes than the kernel itself, so the
    (data-dependent-shape) compaction gathers straight from the NCHW logits on host.
    """
    B, C, H, W = heatmap_logits.shape
    return upsample_mask_nearest(mask, H, W)


def compact_on_host(heatmap_logits, mask_up):
    """Boolean-mask compaction `logits[mask]` -- data-dependent output shape, done on host.

    Returns (patch_logits (N, C), core_idx (N,)) exactly like the PyTorch module.
    """
    # TODO(synk): the variable-length boolean selection has no static-shape Pallas/JAX
    # equivalent; it stays on host (numpy), gathering selected positions from NCHW directly.
    logits = np.asarray(heatmap_logits)            # (B, C, H, W), layout untouched
    sel = np.asarray(mask_up) > 0                  # (B, H, W)
    b_idx, h_idx, w_idx = np.nonzero(sel)          # row-major == '(b h w)' flatten order
    patch_logits = logits[b_idx, :, h_idx, w_idx]  # (N, C)
    core_idx = b_idx.astype(np.int64)
    return patch_logits, core_idx


if __name__ == "__main__":
    key = jax.random.PRNGKey(0)
    k1, k2 = jax.random.split(key)

    B, C, H, W = 2, 4, 16, 16
    h_m, w_m = 8, 8   # half-resolution mask -> integer-ratio (threshold-then-repeat) path
    # NOTE: toy shapes only (W=16 < 128 lanes -> partial stores); production MedSAM shapes
    # have W a multiple of 128 and give lane-dense int8 stores.  Do not benchmark this shape.

    heatmap_logits = jax.random.normal(k1, (B, C, H, W), dtype=jnp.float32)
    mask = (jax.random.uniform(k2, (B, 1, h_m, w_m)) > 0.5).astype(jnp.float32)

    mask_up = masked_prediction(heatmap_logits, mask)
    jax.block_until_ready(mask_up)

    patch_logits, core_idx = compact_on_host(heatmap_logits, mask_up)

    # Pure-numpy reference of the PyTorch module's semantics.
    m_np = np.asarray(mask[:, 0])
    rows = (np.arange(H) * h_m) // H
    cols = (np.arange(W) * w_m) // W
    up_ref = m_np[:, rows][:, :, cols] > 0.5                       # (B, H, W)
    np.testing.assert_array_equal(np.asarray(mask_up) > 0, up_ref)

    logits_np = np.asarray(heatmap_logits)
    logits_flat_ref = np.transpose(logits_np, (0, 2, 3, 1)).reshape(B * H * W, C)
    mask_flat_ref = up_ref.reshape(B * H * W)
    core_ref = np.repeat(np.arange(B), H * W)
    np.testing.assert_array_equal(patch_logits, logits_flat_ref[mask_flat_ref])
    np.testing.assert_array_equal(core_idx, core_ref[mask_flat_ref])

    print("KERNEL_OK")
</pallas_src>

<mosaic_0001>
module attributes {stable_mosaic.version = 11 : i64} {
  func.func @_row_repeat_kernel(%arg0: i32, %arg1: i32, %arg2: memref<1x8x16xi8, #tpu.memory_space<vmem>>, %arg3: memref<1x16x16xi8, #tpu.memory_space<vmem>>) attributes {dimension_semantics = [#tpu.dimension_semantics<parallel>, #tpu.dimension_semantics<arbitrary>], iteration_bounds = array<i64: 2, 1>, scalar_prefetch = 0 : i64, scratch_operands = 0 : i64, tpu.core_type = #tpu.core_type<tc>, window_params = [{transform_indices = @transform_0, window_bounds = array<i64: 1, 8, 16>}, {transform_indices = @transform_1, window_bounds = array<i64: 1, 16, 16>}]} {
    %c0 = arith.constant 0 : index
    %c0_0 = arith.constant 0 : index
    %c0_1 = arith.constant 0 : index
    %0 = vector.load %arg2[%c0, %c0_0, %c0_1] : memref<1x8x16xi8, #tpu.memory_space<vmem>>, vector<1x8x16xi8>
    %1 = vector.shape_cast %0 : vector<1x8x16xi8> to vector<8x16xi8>
    %2 = arith.extsi %1 : vector<8x16xi8> to vector<8x16xi32>
    %3 = vector.shape_cast %2 : vector<8x16xi32> to vector<8x1x16xi32>
    %4 = vector.shape_cast %3 : vector<8x1x16xi32> to vector<8x1x16xi32>
    %5 = vector.broadcast %4 : vector<8x1x16xi32> to vector<8x2x16xi32>
    %6 = vector.shape_cast %5 : vector<8x2x16xi32> to vector<16x16xi32>
    %7 = arith.trunci %6 : vector<16x16xi32> to vector<16x16xi8>
    %c0_2 = arith.constant 0 : index
    %c0_3 = arith.constant 0 : index
    %c0_4 = arith.constant 0 : index
    %8 = vector.load %arg3[%c0_2, %c0_3, %c0_4] : memref<1x16x16xi8, #tpu.memory_space<vmem>>, vector<1x16x16xi8>
    %9 = vector.shape_cast %8 : vector<1x16x16xi8> to vector<16x16xi8>
    %10 = vector.shape_cast %7 : vector<16x16xi8> to vector<1x16x16xi8>
    tpu.vector_store %arg3[%c0_2, %c0_3, %c0_4], %10 {strides = array<i32>} : memref<1x16x16xi8, #tpu.memory_space<vmem>>, vector<1x16x16xi8>,
    return
  }
  func.func @transform_0(%arg0: i32, %arg1: i32) -> (i32, i32, i32) {
    %c0_i32 = arith.constant 0 : i32
    %c0_i32_0 = arith.constant 0 : i32
    return %arg0, %arg1, %c0_i32 : i32, i32, i32
  }
  func.func @transform_1(%arg0: i32, %arg1: i32) -> (i32, i32, i32) {
    %c0_i32 = arith.constant 0 : i32
    %c0_i32_0 = arith.constant 0 : i32
    return %arg0, %arg1, %c0_i32 : i32, i32, i32
  }
}

</mosaic_0001>

<llo_original>
// kernel: tpu_custom_call.1
$region0: #{tpu_custom_call.1}
  #allocation0 [shape = 'u32[]', space=smem, size = 0x4, offset = 0x4, fixed_abs, tag = 'smem constant byte address 0x4 - core index']
  #allocation1 [shape = 'u32[72,128]{1,0:T(1,128)}', space=vmem, size = 0x9000, scoped, tag = 'internal scratch']
  %s0 = inlined_call_operand.hbm [shape: s8[2,8,16], index: 0, kind: input, shape index: {}]
  %s1 = inlined_call_operand.hbm [shape: s8[2,16,16], index: 1, kind: output, shape index: {}]
  %s2 = sld [smem:[#allocation0]]
  $region41: #{tpu_custom_call.1} parent=0
    _
  %s4 = ssub.s32 1, %s2
  %s5 = scalar_select 0, %s4, %s2
  $region1: #{tpu_custom_call.1} parent=0
    #allocation2 [shape = 'u8[2048]{0}', space=vmem, size = 0x800, scoped, tag = 'input window, operand 0']
    #allocation3 [shape = 's32[2]{0}', space=sflag, size = 0x8, scoped, tag = 'scoped memory for tpu_custom_call.1']
    #allocation4 [shape = 's32[2]{0}', space=sflag, size = 0x8, scoped, tag = 'scoped memory for tpu_custom_call.1']
    #allocation5 [shape = 'u8[4096]{0}', space=vmem, size = 0x1000, scoped, tag = 'output window, operand 0']
    %6 = vsyncpa [#allocation3], 0
    %s7 = scalar_lea.sflag [#allocation3], 1
    %8 = vsyncpa %s7, 0
    %9 = vsyncpa [#allocation4], 0
    %s10 = scalar_lea.sflag [#allocation4], 1
    %11 = vsyncpa %s10, 0
    loop: start=0, step=1, limit=4
    $region2: #{tpu_custom_call.1} parent=1 // loop_pre_header
      _
    $region3: #{tpu_custom_call.1} parent=1 // loop_header
      %s13 = sphi 0, %s17
      %p14 = scmp.ge.s32.totalorder %s13, 4
      %s20 = sphi 0, %s32
      %s21 = sphi 0, %s28
      %s22 = sphi 0, %s20
      %s23 = sphi 0, %s21
      %s24 = sphi 0, %s22
      %s25 = sphi 0, %s23
      %s37 = sphi 0, %s39
      %s40 = sphi 0, %s37
      %s41 = sphi 0, %s40
      %s57 = sphi 0, %s41
      %s65 = sphi 0, %s67
      %s68 = sphi 0, %s65
      %s69 = sphi 0, %s68
      %s85 = sphi 0, %s69
    $region4: #{tpu_custom_call.1} parent=1 // loop_header_branch
      %16 = sbr.rel (%p14) target = $region8
    $region5: #{tpu_custom_call.1} parent=1 // loop_body
      %s18 = ssub.s32 %s13, 1
      %s19 = ssub.s32 %s13, 2
      %s26 = sadd.s32 1, %s21
      %p27 = scmp.ge.s32.totalorder %s26, 1
      %s28 = scalar_select %p27, 0, %s26
      %s29 = sadd.s32 1, %s20
      %s30 = scalar_select %p27, %s29, %s20
      %p31 = scmp.ge.s32.totalorder %s30, 2
      %s32 = scalar_select %p31, 0, %s30
      %s33 = ssub.s32 %s20, %s32
      %s34 = ssub.s32 %s21, %s28
      %s35 = sor.u32 %s33, %s34
      %p36 = scmp.eq.s32.totalorder %s35, 0
      %s38 = sadd.s32 %s37, 1
      %s39 = scalar_select %p36, %s37, %s38
      %p42 = pneg %p36
      %p43 = scmp.eq.s32.totalorder %s13, 1
      %p44 = por %p42, %p43
      %p45 = scmp.ne.s32.totalorder %s37, %s40
      %p46 = scmp.eq.s32.totalorder %s13, 0
      %p47 = por %p45, %p46
      %p48 = scmp.ne.s32.totalorder %s37, %s40
      %p49 = scmp.eq.s32.totalorder %s18, 1
      %p50 = por %p48, %p49
      %p51 = scmp.ne.s32.totalorder %s40, %s41
      %p52 = scmp.eq.s32.totalorder %s18, 0
      %p53 = por %p51, %p52
      %p54 = scmp.ne.s32.totalorder %s40, %s41
      %p55 = scmp.eq.s32.totalorder %s19, 1
      %p56 = por %p54, %p55
      %p58 = scmp.ne.s32.totalorder %s41, %s57
      %p59 = scmp.eq.s32.totalorder %s19, 0
      %p60 = por %p58, %p59
      %s61 = ssub.s32 %s20, %s32
      %s62 = ssub.s32 %s21, %s28
      %s63 = sor.u32 %s61, %s62
      %p64 = scmp.eq.s32.totalorder %s63, 0
      %s66 = sadd.s32 %s65, 1
      %s67 = scalar_select %p64, %s65, %s66
      %p70 = pneg %p64
      %p71 = scmp.eq.s32.totalorder %s13, 1
      %p72 = por %p70, %p71
      %p73 = scmp.ne.s32.totalorder %s65, %s68
      %p74 = scmp.eq.s32.totalorder %s13, 0
      %p75 = por %p73, %p74
      %p76 = scmp.ne.s32.totalorder %s65, %s68
      %p77 = scmp.eq.s32.totalorder %s18, 1
      %p78 = por %p76, %p77
      %p79 = scmp.ne.s32.totalorder %s68, %s69
      %p80 = scmp.eq.s32.totalorder %s18, 0
      %p81 = por %p79, %p80
      %p82 = scmp.ne.s32.totalorder %s68, %s69
      %p83 = scmp.eq.s32.totalorder %s19, 1
      %p84 = por %p82, %p83
      %p86 = scmp.ne.s32.totalorder %s69, %s85
      %p87 = scmp.eq.s32.totalorder %s19, 0
      %p88 = por %p86, %p87
      %p89 = scmp.le.s32.totalorder 1, %s13
      %p90 = scmp.lt.s32.totalorder %s13, 3
      %p91 = pnand %p89, %p90
      %p92 = pneg %p91
      // Predicated region
      $region9: #{tpu_custom_call.1} parent=5 // pred_check
        _
      $region10: #{tpu_custom_call.1} parent=5 // pred_check_branch
        %94 = sbr.rel (%p91) target = $region12
      $region11: #{tpu_custom_call.1} parent=5 // pred_region
        %s95 = ssub.s32 %s13, 1
      $region12: #{tpu_custom_call.1} parent=5 // pred_fallthru
        _
      %p96 = scmp.lt.s32.totalorder %s13, 2
      // Predicated region
      $region13: #{tpu_custom_call.1} parent=5 // pred_check
        %p97 = pneg %p96
      $region14: #{tpu_custom_call.1} parent=5 // pred_check_branch
        %99 = sbr.rel (%p97) target = $region16
      $region15: #{tpu_custom_call.1} parent=5 // pred_region
        // Predicated region
        $region17: #{tpu_custom_call.1} parent=15 // pred_check
          %p100 = pneg %p47
        $region18: #{tpu_custom_call.1} parent=15 // pred_check_branch
          %102 = sbr.rel (%p100) target = $region20
        $region19: #{tpu_custom_call.1} parent=15 // pred_region
          %s103 = sand.u32 %s37, 1
          %s104 = scalar_lea.sflag [#allocation3], %s103
          %s105 = sand.u32 %s37, 1
          %s106 = smul.addr %s105, 2
          %s107 = scalar_lea.vmem [#allocation2], %s106
          %109 = vsyncadd %s104, 0
          %s110 = sadd.s32 %s21, %s20
          %s111 = smul.addr %s110, 2
          %s112 = scalar_lea.hbm %s0, %s111
          %s114 = sshll.u32 %s112, 4
          %s115 = int_to_ptr.hbm [resolvable:$true] %s114
          %s116 = sshll.u32 %s107, 4
          %s117 = int_to_ptr.vmem [resolvable:$true] %s116
          %119 = dma.hbm_to_vmem [thread:$0]  %s115, 32, %s117, %s104
        $region20: #{tpu_custom_call.1} parent=15 // pred_fallthru
          _
      $region16: #{tpu_custom_call.1} parent=5 // pred_fallthru
        _
      %p120 = scmp.le.s32.totalorder 1, %s13
      %p121 = scmp.lt.s32.totalorder %s13, 3
      %p122 = pnand %p120, %p121
      %p123 = pneg %p122
      // Predicated region
      $region21: #{tpu_custom_call.1} parent=5 // pred_check
        _
      $region22: #{tpu_custom_call.1} parent=5 // pred_check_branch
        %125 = sbr.rel (%p122) target = $region24
      $region23: #{tpu_custom_call.1} parent=5 // pred_region
        %s126 = ssub.s32 %s13, 1
        %s127 = sand.u32 %s40, 1
        %s128 = scalar_lea.sflag [#allocation3], %s127
        %s129 = sand.u32 %s40, 1
        %s130 = smul.addr %s129, 2
        %s131 = scalar_lea.vmem [#allocation2], %s130
        // Predicated region
        $region25: #{tpu_custom_call.1} parent=23 // pred_check
          %p132 = pneg %p53
        $region26: #{tpu_custom_call.1} parent=23 // pred_check_branch
          %134 = sbr.rel (%p132) target = $region28
        $region27: #{tpu_custom_call.1} parent=23 // pred_region
          %136 = dma.done %s128, 32
        $region28: #{tpu_custom_call.1} parent=23 // pred_fallthru
          _
        %s137 = sand.u32 %s40, 1
        %s138 = scalar_lea.sflag [#allocation3], %s137
        %s139 = sand.u32 %s40, 1
        %s140 = smul.addr %s139, 2
        %s141 = scalar_lea.vmem [#allocation2], %s140
        %p142 = pneg %p53
        %p143 = pneg %p50
        %p144 = pneg %p81
        %p145 = pneg %p78
        %s146 = sand.u32 %s68, 1
        %s147 = scalar_lea.sflag [#allocation4], %s146
        %s148 = sand.u32 %s68, 1
        %s149 = smul.addr %s148, 4
        %s150 = scalar_lea.vmem [#allocation5], %s149
        %s151 = smul.u32 2, %s23
        %v152 = vld [vmem:[%s131] sm:$0x3]
        %v153 = vunpack.c.0.s8 %v152
        %v154 = vrot.slane %v153, 1
        %v155 = vrot.slane %v153, 2
        %v156 = vrot.slane %v153, 3
        %v157 = vrot.slane %v153, 4
        %v158 = vrot.slane %v153, 5
        %v159 = vrot.slane %v153, 6
        %v160 = vrot.slane %v153, 7
        %v161 = vperm.slane %v153, 0
        %v162 = vperm.slane %v154, 0
        %v163 = vperm.slane %v155, 0
        %v164 = vperm.slane %v156, 0
        %v165 = vperm.slane %v157, 0
        %v166 = vperm.slane %v158, 0
        %v167 = vperm.slane %v159, 0
        %v168 = vperm.slane %v160, 0
        %169 = vst [vmem:[#allocation1] ss:$4 sm:$0xff] %v161
        %s170 = scalar_lea.vmem [#allocation1], 1
        %171 = vst [vmem:[%s170] ss:$4 sm:$0xff] %v162
        %s172 = scalar_lea.vmem [#allocation1], 2
        %173 = vst [vmem:[%s172] ss:$4 sm:$0xff] %v163
        %s174 = scalar_lea.vmem [#allocation1], 3
        %175 = vst [vmem:[%s174] ss:$4 sm:$0xff] %v164
        %s176 = scalar_lea.vmem [#allocation1], 32
        %177 = vst [vmem:[%s176] ss:$4 sm:$0xff] %v165
        %s178 = scalar_lea.vmem [#allocation1], 33
        %179 = vst [vmem:[%s178] ss:$4 sm:$0xff] %v166
        %s180 = scalar_lea.vmem [#allocation1], 34
        %181 = vst [vmem:[%s180] ss:$4 sm:$0xff] %v167
        %s182 = scalar_lea.vmem [#allocation1], 35
        %183 = vst [vmem:[%s182] ss:$4 sm:$0xff] %v168
        %v184 = vld.sshfl [vmem:[#allocation1] sm:$0xff pattern:$0x73625140]
        %v185 = vld.sshfl [vmem:[#allocation1 + $0x20] sm:$0xff pattern:$0x73625140]
        %v186 = vpack.c.b16 %v184, %v184
        %v187 = vpack.c.b8 %v186, %v186
        %v188 = vpack.c.b16 %v185, %v185
        %v189 = vpack.c.b8 %v188, %v188
        %vm190 = vcmask 123904
        %191 = vst.msk [vmem:[%s150] sm:$0x3] %vm190, %v187
        %192 = vst.msk [vmem:[%s150 + $0x2] sm:$0x3] %vm190, %v189
        %s193 = sand.u32 %s68, 1
        %s194 = scalar_lea.sflag [#allocation4], %s193
        %s195 = sand.u32 %s68, 1
        %s196 = smul.addr %s195, 4
        %s197 = scalar_lea.vmem [#allocation5], %s196
        // Predicated region
        $region29: #{tpu_custom_call.1} parent=23 // pred_check
          %p198 = pneg %p78
        $region30: #{tpu_custom_call.1} parent=23 // pred_check_branch
          %200 = sbr.rel (%p198) target = $region32
        $region31: #{tpu_custom_call.1} parent=23 // pred_region
          %s201 = smul.u32 2, %s23
          %203 = vsyncadd %s194, 0
          %s204 = smul.addr %s22, 2
          %s205 = sadd.s32 %s201, %s204
          %s206 = smul.addr %s205, 2
          %s207 = scalar_lea.hbm %s1, %s206
          %s208 = sshll.u32 %s197, 4
          %s209 = int_to_ptr.vmem [resolvable:$true] %s208
          %s210 = sshll.u32 %s207, 4
          %s211 = int_to_ptr.hbm [resolvable:$true] %s210
          %216 = dma.vmem_to_hbm [thread:$0]  %s209, 64, %s211, %s194, 32, 32, 2
        $region32: #{tpu_custom_call.1} parent=23 // pred_fallthru
          _
      $region24: #{tpu_custom_call.1} parent=5 // pred_fallthru
        _
      %p217 = scmp.le.s32.totalorder 2, %s13
      // Predicated region
      $region33: #{tpu_custom_call.1} parent=5 // pred_check
        %p218 = pneg %p217
      $region34: #{tpu_custom_call.1} parent=5 // pred_check_branch
        %220 = sbr.rel (%p218) target = $region36
      $region35: #{tpu_custom_call.1} parent=5 // pred_region
        %s221 = ssub.s32 %s13, 2
        // Predicated region
        $region37: #{tpu_custom_call.1} parent=35 // pred_check
          %p222 = pneg %p84
        $region38: #{tpu_custom_call.1} parent=35 // pred_check_branch
          %224 = sbr.rel (%p222) target = $region40
        $region39: #{tpu_custom_call.1} parent=35 // pred_region
          %s225 = sand.u32 %s69, 1
          %s226 = scalar_lea.sflag [#allocation4], %s225
          %s227 = sand.u32 %s69, 1
          %s228 = smul.addr %s227, 4
          %s229 = scalar_lea.vmem [#allocation5], %s228
          %231 = dma.done %s226, 64
        $region40: #{tpu_custom_call.1} parent=35 // pred_fallthru
          _
      $region36: #{tpu_custom_call.1} parent=5 // pred_fallthru
        _
    $region6: #{tpu_custom_call.1} parent=1 // loop_footer
      %s17 = sadd.s32 1, %s13
    $region7: #{tpu_custom_call.1} parent=1 // loop_footer_branch
      %12 = sbr.rel target = $region3
    $region8: #{tpu_custom_call.1} parent=1 // loop_exit
      _
    %232 = vsyncpa [#allocation3], 1
    %s233 = scalar_lea.sflag [#allocation3], 1
    %234 = vsyncpa %s233, 1
    %235 = vsyncpa [#allocation4], 1
    %s236 = scalar_lea.sflag [#allocation4], 1
    %237 = vsyncpa %s236, 1

</llo_original>
